<compile_context>
chip_gen: v6e
topology: v6e:2x2x1
jax: 0.10.0
libtpu: 0.0.40
codegen_flags: <defaults>
</compile_context>

<pallas_src>
import functools

import numpy as np
import jax
import jax.numpy as jnp
from jax import lax
from jax.experimental import pallas as pl
from jax.experimental.pallas import tpu as pltpu


def _round_up(x: int, m: int) -> int:
    return ((x + m - 1) // m) * m


def _tpu_generation() -> int:
    """Best-effort TPU generation from device_kind (7 -> v7x, 6 -> v6e, 5 -> v5e)."""
    try:
        kind = jax.devices()[0].device_kind
    except Exception:
        return 6
    for gen in (7, 6, 5):
        if str(gen) in kind:
            return gen
    return 6


_GEN = _tpu_generation()
if _GEN >= 7:
    # v7x: 64 MiB VMEM per TensorCore, ~3.2 TB/s HBM per TC, 2 TCs per chip.
    _VMEM_LIMIT = 52 * 1024 * 1024
    _BLOCK_BYTES = 6 * 1024 * 1024      # f32-equivalent bytes streamed per grid step
    _N_CHUNKS = 2                       # shard the Gram's D stream across both TCs
else:
    # v5e / v6e: 128 MiB VMEM, single TensorCore -> bigger blocks, no chunking.
    _VMEM_LIMIT = 100 * 1024 * 1024
    _BLOCK_BYTES = 12 * 1024 * 1024
    _N_CHUNKS = 1


# ---------------------------------------------------------------------------
# Pallas kernels
# ---------------------------------------------------------------------------
def _gram_kernel(g_ref, out_ref, *, num_tasks, tile_sb, sb_valid,
                 steps_per_chunk, needs_mask):
    """Accumulate per-pair vreg partials of GG = G @ G^T for one D-chunk."""
    d = pl.program_id(1)

    @pl.when(d == 0)
    def _():
        out_ref[...] = jnp.zeros_like(out_ref)

    def accumulate(blk):
        # blk: (K, tile_sb, 8, 128) f32.  GG is only K x K, so the MXU is the
        # wrong unit; do K(K+1)/2 elementwise multiplies + reductions on the VPU
        # at full vreg utilization and keep per-pair (8, 128) partial sums
        # resident in the output block (collapsed to (K, K) outside the kernel).
        for i in range(num_tasks):
            for j in range(i, num_tasks):
                part = jnp.sum(blk[i] * blk[j], axis=0)          # (8, 128)
                out_ref[i, j, :, :] += part
                if i != j:
                    out_ref[j, i, :, :] += part

    blk = g_ref[...].astype(jnp.float32)
    if needs_mask:
        # Only boundary tiles (ragged tail / clamped chunk-padding tiles) pay
        # for the iota/compare/select; full tiles take the unmasked branch.
        sb0 = (pl.program_id(0) * steps_per_chunk + d) * tile_sb
        is_boundary = sb0 + tile_sb > sb_valid

        @pl.when(is_boundary)
        def _():
            sb = lax.broadcasted_iota(jnp.int32, blk.shape, 1)
            accumulate(jnp.where(sb0 + sb < sb_valid, blk, 0.0))

        @pl.when(jnp.logical_not(is_boundary))
        def _():
            accumulate(blk)
    else:
        accumulate(blk)


def _combine_kernel(w_ref, g_ref, out_ref, *, inv_k, num_tasks):
    """out = G / K + sum_j w_j * g_j  (w pre-scaled by lambda / K, in SMEM)."""
    g = g_ref[...].astype(jnp.float32)                 # (K, tile_d), upcast hoisted once
    ids = lax.broadcasted_iota(jnp.int32, (num_tasks, 1), 0)
    w_col = jnp.zeros((num_tasks, 1), jnp.float32)
    for j in range(num_tasks):                         # tiny (K, 1) weight column
        w_col = jnp.where(ids == j, w_ref[j], w_col)
    gw = jnp.sum(w_col * g, axis=0, keepdims=True)     # (1, tile_d) weighted sum
    out_ref[...] = (g * inv_k + gw).astype(out_ref.dtype)


# ---------------------------------------------------------------------------
# Pallas wrappers
# ---------------------------------------------------------------------------
def gram_matrix(g2d: jax.Array, block_bytes: int, n_chunks: int) -> jax.Array:
    """GG = G @ G^T via an HBM stream over a dense (K, SB, 8, 128) view."""
    K, D = g2d.shape
    d_pad = _round_up(D, 1024)
    if d_pad != D:
        # TODO(synk): ragged D pays a one-time zero-pad copy so the kernel can use
        # a dense (8,128)-aligned view; a masked 2-D fallback kernel would avoid it.
        g2d = jnp.pad(g2d, ((0, 0), (0, d_pad - D)))
    sb_total = d_pad // 1024
    g4d = g2d.reshape(K, sb_total, 8, 128)

    tile_sb = max(1, min(block_bytes // (K * 4096), sb_total))
    n_tiles = pl.cdiv(sb_total, tile_sb)
    n_chunks = max(1, min(n_chunks, n_tiles))
    steps = pl.cdiv(n_tiles, n_chunks)
    needs_mask = (steps * n_chunks * tile_sb) != sb_total

    if steps * n_chunks != n_tiles:
        # Fully out-of-range chunk-padding tiles are clamped in range; the kernel
        # masks them to zero, so they contribute nothing.
        def g_map(c, d):
            return (0, jnp.minimum(c * steps + d, n_tiles - 1), 0, 0)
    else:
        def g_map(c, d):
            return (0, c * steps + d, 0, 0)

    kern = functools.partial(
        _gram_kernel, num_tasks=K, tile_sb=tile_sb, sb_valid=sb_total,
        steps_per_chunk=steps, needs_mask=needs_mask)

    partials = pl.pallas_call(
        kern,
        out_shape=jax.ShapeDtypeStruct((n_chunks, K, K, 8, 128), jnp.float32),
        grid_spec=pltpu.PrefetchScalarGridSpec(
            num_scalar_prefetch=0,
            grid=(n_chunks, steps),
            in_specs=[pl.BlockSpec((K, tile_sb, 8, 128), g_map)],
            out_specs=pl.BlockSpec((None, K, K, 8, 128),
                                   lambda c, d: (c, 0, 0, 0, 0)),
        ),
        compiler_params=pltpu.CompilerParams(
            dimension_semantics=("parallel", "arbitrary"),
            vmem_limit_bytes=_VMEM_LIMIT),
        cost_estimate=pl.CostEstimate(
            flops=2 * K * K * d_pad, transcendentals=0,
            bytes_accessed=K * d_pad * g2d.dtype.itemsize
            + n_chunks * K * K * 8 * 128 * 4),
    )(g4d)
    # Collapse vreg-level per-pair partials and the chunk axis to (K, K).
    return jnp.sum(partials, axis=(0, 3, 4))


def combine(g2d: jax.Array, scaled_w: jax.Array, inv_k: float,
            block_bytes: int, out_dtype) -> jax.Array:
    K, D = g2d.shape
    if D < 128:
        tile_d = D
    else:
        tile_d = block_bytes // (K * 4)
        tile_d = max(128, min((tile_d // 128) * 128, (D // 128) * 128))
    n_tiles = pl.cdiv(D, tile_d)
    out_isize = jnp.dtype(out_dtype).itemsize
    kern = functools.partial(_combine_kernel, inv_k=inv_k, num_tasks=K)
    return pl.pallas_call(
        kern,
        out_shape=jax.ShapeDtypeStruct((K, D), out_dtype),
        grid_spec=pltpu.PrefetchScalarGridSpec(
            num_scalar_prefetch=1,                       # scaled_w -> SMEM, loaded once
            grid=(n_tiles,),
            in_specs=[pl.BlockSpec((K, tile_d), lambda d, w: (0, d))],
            out_specs=pl.BlockSpec((K, tile_d), lambda d, w: (0, d)),
        ),
        compiler_params=pltpu.CompilerParams(
            dimension_semantics=("parallel",),
            vmem_limit_bytes=_VMEM_LIMIT),
        cost_estimate=pl.CostEstimate(
            flops=4 * K * D, transcendentals=0,
            bytes_accessed=K * D * (g2d.dtype.itemsize + out_isize)),
    )(scaled_w, g2d)


# ---------------------------------------------------------------------------
# On-device simplex-constrained QP solver (replaces scipy SLSQP)
# ---------------------------------------------------------------------------
def _proj_simplex(v: jax.Array) -> jax.Array:
    """Euclidean projection onto the probability simplex (K-vector)."""
    K = v.shape[0]
    u = jnp.flip(jnp.sort(v))
    css = jnp.cumsum(u)
    idx = jnp.arange(1, K + 1, dtype=v.dtype)
    cond = u * idx > (css - 1.0)
    rho = jnp.max(jnp.where(cond, jnp.arange(K), -1))
    theta = (jnp.take(css, rho) - 1.0) / (rho + 1).astype(v.dtype)
    return jnp.maximum(v - theta, 0.0)


def _solve_cagrad_weights(A: jax.Array, c: jax.Array, num_tasks: int,
                          iters: int) -> jax.Array:
    # TODO(synk): the reference solves this K-dim simplex QP on the host with
    # scipy SLSQP; here it is solved on device (no host round trip) with
    # Nesterov-accelerated projected gradient descent plus adaptive restart.
    A = A.astype(jnp.float32)
    b = jnp.ones((num_tasks,), jnp.float32) / num_tasks
    Ab = A @ b
    s0 = jnp.sqrt(jnp.dot(b, Ab) + 1e-8)
    # Step from a Lipschitz-style bound (||A||_F >= lambda_max for PSD A).
    lr = 1.0 / (jnp.linalg.norm(A) * (1.0 + c / (s0 + 1e-8)) + 1e-8)

    def body(_, carry):
        x, x_prev, t = carry
        t_next = 0.5 * (1.0 + jnp.sqrt(1.0 + 4.0 * t * t))
        y = x + ((t - 1.0) / t_next) * (x - x_prev)
        Ay = A @ y
        grad = Ab + c * Ay * lax.rsqrt(jnp.dot(y, Ay) + 1e-8)
        x_new = _proj_simplex(y - lr * grad)
        # Adaptive (gradient-mapping) restart keeps the fixed step robust.
        restart = jnp.dot(y - x_new, x_new - x) > 0.0
        return (x_new,
                jnp.where(restart, x_new, x),
                jnp.where(restart, 1.0, t_next))

    x, _, _ = lax.fori_loop(0, iters, body, (b, b, jnp.float32(1.0)))
    return x


# ---------------------------------------------------------------------------
# CAGrad forward
# ---------------------------------------------------------------------------
@functools.partial(jax.jit, static_argnames=("block_bytes", "n_chunks", "pgd_iters"))
def cagrad_forward(grads: jax.Array, alpha, block_bytes: int = None,
                   n_chunks: int = None, pgd_iters: int = 50):
    shape = grads.shape
    num_tasks = shape[0]
    g2d = jnp.reshape(grads, (num_tasks, -1))          # native dtype, free reshape
    if block_bytes is None:
        block_bytes = _BLOCK_BYTES
    if n_chunks is None:
        n_chunks = _N_CHUNKS

    # 1) Gram matrix GG = G @ G^T (Pallas, reduction over D, chunked on v7x).
    GG = gram_matrix(g2d, block_bytes, n_chunks)

    # 2) Scalars + tiny simplex-constrained QP, all on device (no host bubble).
    g0_norm = jnp.sqrt(GG.mean() + 1e-8)
    c = alpha * g0_norm + 1e-8
    w = _solve_cagrad_weights(GG, c, num_tasks, pgd_iters)
    gw_norm = jnp.sqrt(jnp.maximum(w @ GG @ w, 0.0))   # == ||sum_j w_j g_j||
    lmbda = c / (gw_norm + 1e-8)
    scaled_w = ((lmbda / num_tasks) * w).astype(jnp.float32)

    # 3) Recombination (Pallas), output in the input dtype.
    g_new = combine(g2d, scaled_w, 1.0 / num_tasks, block_bytes, grads.dtype)
    return jnp.reshape(g_new, shape), GG, w, lmbda


# ---------------------------------------------------------------------------
def _check(grads, out, GG, w, lmbda, name):
    K = grads.shape[0]
    g2d_np = np.asarray(jax.device_get(grads)).reshape(K, -1).astype(np.float64)
    GG_ref = g2d_np @ g2d_np.T
    GG_np = np.asarray(jax.device_get(GG), dtype=np.float64)
    assert np.allclose(GG_np, GG_ref, rtol=1e-4, atol=1e-3), f"{name}: GG mismatch"

    w_np = np.asarray(jax.device_get(w), dtype=np.float64)
    lm = float(jax.device_get(lmbda))
    gw = (g2d_np * w_np[:, None]).sum(axis=0)            # (D,)
    g_ref = (g2d_np + lm * gw[None, :]) / K
    out_np = np.asarray(jax.device_get(out)).reshape(K, -1).astype(np.float64)
    assert np.allclose(out_np, g_ref, rtol=1e-4, atol=1e-4), f"{name}: output mismatch"


if __name__ == "__main__":
    key = jax.random.PRNGKey(0)
    k1, k2, k3 = jax.random.split(key, 3)

    # Case 1: K=4 tasks, D = 1024 (aligned: no pad, single tile, single chunk).
    grads1 = jax.random.normal(k1, (4, 8, 128), dtype=jnp.float32)
    out1, GG1, w1, lm1 = cagrad_forward(grads1, 0.5)
    out1 = jax.block_until_ready(out1)
    _check(grads1, out1, GG1, w1, lm1, "case1")

    # Case 2: K=3 tasks, D = 1500 (ragged: exercises the one-time pad path).
    grads2 = jax.random.normal(k2, (3, 5, 300), dtype=jnp.float32)
    out2, GG2, w2, lm2 = cagrad_forward(grads2, 0.3)
    out2 = jax.block_until_ready(out2)
    _check(grads2, out2, GG2, w2, lm2, "case2")

    # Case 3: K=3, D = 7000 with a tiny block target and 2 chunks so the
    # multi-tile reduction, clamped chunk index map, boundary-gated mask and
    # partial combine store are all exercised at test size.
    grads3 = jax.random.normal(k3, (3, 7, 1000), dtype=jnp.float32)
    out3, GG3, w3, lm3 = cagrad_forward(grads3, 0.4, block_bytes=12288, n_chunks=2)
    out3 = jax.block_until_ready(out3)
    _check(grads3, out3, GG3, w3, lm3, "case3")

    print("KERNEL_OK")
</pallas_src>

<mosaic_0001>
module attributes {stable_mosaic.version = 11 : i64} {
  func.func @_gram_kernel(%arg0: i32, %arg1: i32, %arg2: memref<4x1x8x128xf32, #tpu.memory_space<vmem>>, %arg3: memref<1x4x4x8x128xf32, #tpu.memory_space<vmem>>) attributes {dimension_semantics = [#tpu.dimension_semantics<parallel>, #tpu.dimension_semantics<arbitrary>], iteration_bounds = array<i64: 1, 1>, scalar_prefetch = 0 : i64, scratch_operands = 0 : i64, tpu.core_type = #tpu.core_type<tc>, window_params = [{transform_indices = @transform_0, window_bounds = array<i64: 4, 1, 8, 128>}, {transform_indices = @transform_1, window_bounds = array<i64: 1, 4, 4, 8, 128>}]} {
    %c0_i32 = arith.constant 0 : i32
    %0 = arith.cmpi eq, %arg1, %c0_i32 : i32
    %1 = arith.extui %0 : i1 to i32
    %c0_i32_0 = arith.constant 0 : i32
    %2 = arith.cmpi ne, %1, %c0_i32_0 : i32
    scf.if %2 {
      %cst_170 = arith.constant 0.000000e+00 : f32
      %160 = vector.broadcast %cst_170 : f32 to vector<4x4x8x128xf32>
      %c0_171 = arith.constant 0 : index
      %c0_172 = arith.constant 0 : index
      %c0_173 = arith.constant 0 : index
      %c0_174 = arith.constant 0 : index
      %c0_175 = arith.constant 0 : index
      %161 = vector.load %arg3[%c0_171, %c0_172, %c0_173, %c0_174, %c0_175] : memref<1x4x4x8x128xf32, #tpu.memory_space<vmem>>, vector<1x4x4x8x128xf32>
      %162 = vector.shape_cast %161 : vector<1x4x4x8x128xf32> to vector<4x4x8x128xf32>
      %163 = vector.shape_cast %160 : vector<4x4x8x128xf32> to vector<1x4x4x8x128xf32>
      tpu.vector_store %arg3[%c0_171, %c0_172, %c0_173, %c0_174, %c0_175], %163 {strides = array<i32>} : memref<1x4x4x8x128xf32, #tpu.memory_space<vmem>>, vector<1x4x4x8x128xf32>,
    } else {
    }
    %c0 = arith.constant 0 : index
    %c0_1 = arith.constant 0 : index
    %c0_2 = arith.constant 0 : index
    %c0_3 = arith.constant 0 : index
    %3 = vector.load %arg2[%c0, %c0_1, %c0_2, %c0_3] : memref<4x1x8x128xf32, #tpu.memory_space<vmem>>, vector<4x1x8x128xf32>
    %4 = vector.extract_strided_slice %3 {offsets = [0, 0, 0, 0], sizes = [1, 1, 8, 128], strides = [1, 1, 1, 1]} : vector<4x1x8x128xf32> to vector<1x1x8x128xf32>
    %5 = vector.shape_cast %4 : vector<1x1x8x128xf32> to vector<1x8x128xf32>
    %6 = vector.extract_strided_slice %3 {offsets = [0, 0, 0, 0], sizes = [1, 1, 8, 128], strides = [1, 1, 1, 1]} : vector<4x1x8x128xf32> to vector<1x1x8x128xf32>
    %7 = vector.shape_cast %6 : vector<1x1x8x128xf32> to vector<1x8x128xf32>
    %8 = arith.mulf %5, %7 : vector<1x8x128xf32>
    %cst = arith.constant dense<0.000000e+00> : vector<8x128xf32>
    %9 = vector.multi_reduction <add>, %8, %cst [0] : vector<1x8x128xf32> to vector<8x128xf32>
    %c0_4 = arith.constant 0 : index
    %c0_5 = arith.constant 0 : index
    %c0_6 = arith.constant 0 : index
    %c0_7 = arith.constant 0 : index
    %c0_8 = arith.constant 0 : index
    %10 = vector.load %arg3[%c0_4, %c0_5, %c0_6, %c0_7, %c0_8] : memref<1x4x4x8x128xf32, #tpu.memory_space<vmem>>, vector<1x1x1x8x128xf32>
    %11 = vector.shape_cast %10 : vector<1x1x1x8x128xf32> to vector<8x128xf32>
    %12 = arith.addf %11, %9 : vector<8x128xf32>
    %c0_9 = arith.constant 0 : index
    %c0_10 = arith.constant 0 : index
    %c0_11 = arith.constant 0 : index
    %c0_12 = arith.constant 0 : index
    %c0_13 = arith.constant 0 : index
    %13 = vector.load %arg3[%c0_9, %c0_10, %c0_11, %c0_12, %c0_13] : memref<1x4x4x8x128xf32, #tpu.memory_space<vmem>>, vector<1x1x1x8x128xf32>
    %14 = vector.shape_cast %13 : vector<1x1x1x8x128xf32> to vector<8x128xf32>
    %15 = vector.shape_cast %12 : vector<8x128xf32> to vector<1x1x1x8x128xf32>
    tpu.vector_store %arg3[%c0_9, %c0_10, %c0_11, %c0_12, %c0_13], %15 {strides = array<i32>} : memref<1x4x4x8x128xf32, #tpu.memory_space<vmem>>, vector<1x1x1x8x128xf32>,
    %16 = vector.extract_strided_slice %3 {offsets = [0, 0, 0, 0], sizes = [1, 1, 8, 128], strides = [1, 1, 1, 1]} : vector<4x1x8x128xf32> to vector<1x1x8x128xf32>
    %17 = vector.shape_cast %16 : vector<1x1x8x128xf32> to vector<1x8x128xf32>
    %18 = vector.extract_strided_slice %3 {offsets = [1, 0, 0, 0], sizes = [1, 1, 8, 128], strides = [1, 1, 1, 1]} : vector<4x1x8x128xf32> to vector<1x1x8x128xf32>
    %19 = vector.shape_cast %18 : vector<1x1x8x128xf32> to vector<1x8x128xf32>
    %20 = arith.mulf %17, %19 : vector<1x8x128xf32>
    %cst_14 = arith.constant dense<0.000000e+00> : vector<8x128xf32>
    %21 = vector.multi_reduction <add>, %20, %cst_14 [0] : vector<1x8x128xf32> to vector<8x128xf32>
    %c0_15 = arith.constant 0 : index
    %c0_16 = arith.constant 0 : index
    %c1 = arith.constant 1 : index
    %c0_17 = arith.constant 0 : index
    %c0_18 = arith.constant 0 : index
    %22 = vector.load %arg3[%c0_15, %c0_16, %c1, %c0_17, %c0_18] : memref<1x4x4x8x128xf32, #tpu.memory_space<vmem>>, vector<1x1x1x8x128xf32>
    %23 = vector.shape_cast %22 : vector<1x1x1x8x128xf32> to vector<8x128xf32>
    %24 = arith.addf %23, %21 : vector<8x128xf32>
    %c0_19 = arith.constant 0 : index
    %c0_20 = arith.constant 0 : index
    %c1_21 = arith.constant 1 : index
    %c0_22 = arith.constant 0 : index
    %c0_23 = arith.constant 0 : index
    %25 = vector.load %arg3[%c0_19, %c0_20, %c1_21, %c0_22, %c0_23] : memref<1x4x4x8x128xf32, #tpu.memory_space<vmem>>, vector<1x1x1x8x128xf32>
    %26 = vector.shape_cast %25 : vector<1x1x1x8x128xf32> to vector<8x128xf32>
    %27 = vector.shape_cast %24 : vector<8x128xf32> to vector<1x1x1x8x128xf32>
    tpu.vector_store %arg3[%c0_19, %c0_20, %c1_21, %c0_22, %c0_23], %27 {strides = array<i32>} : memref<1x4x4x8x128xf32, #tpu.memory_space<vmem>>, vector<1x1x1x8x128xf32>,
    %c0_24 = arith.constant 0 : index
    %c1_25 = arith.constant 1 : index
    %c0_26 = arith.constant 0 : index
    %c0_27 = arith.constant 0 : index
    %c0_28 = arith.constant 0 : index
    %28 = vector.load %arg3[%c0_24, %c1_25, %c0_26, %c0_27, %c0_28] : memref<1x4x4x8x128xf32, #tpu.memory_space<vmem>>, vector<1x1x1x8x128xf32>
    %29 = vector.shape_cast %28 : vector<1x1x1x8x128xf32> to vector<8x128xf32>
    %30 = arith.addf %29, %21 : vector<8x128xf32>
    %c0_29 = arith.constant 0 : index
    %c1_30 = arith.constant 1 : index
    %c0_31 = arith.constant 0 : index
    %c0_32 = arith.constant 0 : index
    %c0_33 = arith.constant 0 : index
    %31 = vector.load %arg3[%c0_29, %c1_30, %c0_31, %c0_32, %c0_33] : memref<1x4x4x8x128xf32, #tpu.memory_space<vmem>>, vector<1x1x1x8x128xf32>
    %32 = vector.shape_cast %31 : vector<1x1x1x8x128xf32> to vector<8x128xf32>
    %33 = vector.shape_cast %30 : vector<8x128xf32> to vector<1x1x1x8x128xf32>
    tpu.vector_store %arg3[%c0_29, %c1_30, %c0_31, %c0_32, %c0_33], %33 {strides = array<i32>} : memref<1x4x4x8x128xf32, #tpu.memory_space<vmem>>, vector<1x1x1x8x128xf32>,
    %34 = vector.extract_strided_slice %3 {offsets = [0, 0, 0, 0], sizes = [1, 1, 8, 128], strides = [1, 1, 1, 1]} : vector<4x1x8x128xf32> to vector<1x1x8x128xf32>
    %35 = vector.shape_cast %34 : vector<1x1x8x128xf32> to vector<1x8x128xf32>
    %36 = vector.extract_strided_slice %3 {offsets = [2, 0, 0, 0], sizes = [1, 1, 8, 128], strides = [1, 1, 1, 1]} : vector<4x1x8x128xf32> to vector<1x1x8x128xf32>
    %37 = vector.shape_cast %36 : vector<1x1x8x128xf32> to vector<1x8x128xf32>
    %38 = arith.mulf %35, %37 : vector<1x8x128xf32>
    %cst_34 = arith.constant dense<0.000000e+00> : vector<8x128xf32>
    %39 = vector.multi_reduction <add>, %38, %cst_34 [0] : vector<1x8x128xf32> to vector<8x128xf32>
    %c0_35 = arith.constant 0 : index
    %c0_36 = arith.constant 0 : index
    %c2 = arith.constant 2 : index
    %c0_37 = arith.constant 0 : index
    %c0_38 = arith.constant 0 : index
    %40 = vector.load %arg3[%c0_35, %c0_36, %c2, %c0_37, %c0_38] : memref<1x4x4x8x128xf32, #tpu.memory_space<vmem>>, vector<1x1x1x8x128xf32>
    %41 = vector.shape_cast %40 : vector<1x1x1x8x128xf32> to vector<8x128xf32>
    %42 = arith.addf %41, %39 : vector<8x128xf32>
    %c0_39 = arith.constant 0 : index
    %c0_40 = arith.constant 0 : index
    %c2_41 = arith.constant 2 : index
    %c0_42 = arith.constant 0 : index
    %c0_43 = arith.constant 0 : index
    %43 = vector.load %arg3[%c0_39, %c0_40, %c2_41, %c0_42, %c0_43] : memref<1x4x4x8x128xf32, #tpu.memory_space<vmem>>, vector<1x1x1x8x128xf32>
    %44 = vector.shape_cast %43 : vector<1x1x1x8x128xf32> to vector<8x128xf32>
    %45 = vector.shape_cast %42 : vector<8x128xf32> to vector<1x1x1x8x128xf32>
    tpu.vector_store %arg3[%c0_39, %c0_40, %c2_41, %c0_42, %c0_43], %45 {strides = array<i32>} : memref<1x4x4x8x128xf32, #tpu.memory_space<vmem>>, vector<1x1x1x8x128xf32>,
    %c0_44 = arith.constant 0 : index
    %c2_45 = arith.constant 2 : index
    %c0_46 = arith.constant 0 : index
    %c0_47 = arith.constant 0 : index
    %c0_48 = arith.constant 0 : index
    %46 = vector.load %arg3[%c0_44, %c2_45, %c0_46, %c0_47, %c0_48] : memref<1x4x4x8x128xf32, #tpu.memory_space<vmem>>, vector<1x1x1x8x128xf32>
    %47 = vector.shape_cast %46 : vector<1x1x1x8x128xf32> to vector<8x128xf32>
    %48 = arith.addf %47, %39 : vector<8x128xf32>
    %c0_49 = arith.constant 0 : index
    %c2_50 = arith.constant 2 : index
    %c0_51 = arith.constant 0 : index
    %c0_52 = arith.constant 0 : index
    %c0_53 = arith.constant 0 : index
    %49 = vector.load %arg3[%c0_49, %c2_50, %c0_51, %c0_52, %c0_53] : memref<1x4x4x8x128xf32, #tpu.memory_space<vmem>>, vector<1x1x1x8x128xf32>
    %50 = vector.shape_cast %49 : vector<1x1x1x8x128xf32> to vector<8x128xf32>
    %51 = vector.shape_cast %48 : vector<8x128xf32> to vector<1x1x1x8x128xf32>
    tpu.vector_store %arg3[%c0_49, %c2_50, %c0_51, %c0_52, %c0_53], %51 {strides = array<i32>} : memref<1x4x4x8x128xf32, #tpu.memory_space<vmem>>, vector<1x1x1x8x128xf32>,
    %52 = vector.extract_strided_slice %3 {offsets = [0, 0, 0, 0], sizes = [1, 1, 8, 128], strides = [1, 1, 1, 1]} : vector<4x1x8x128xf32> to vector<1x1x8x128xf32>
    %53 = vector.shape_cast %52 : vector<1x1x8x128xf32> to vector<1x8x128xf32>
    %54 = vector.extract_strided_slice %3 {offsets = [3, 0, 0, 0], sizes = [1, 1, 8, 128], strides = [1, 1, 1, 1]} : vector<4x1x8x128xf32> to vector<1x1x8x128xf32>
    %55 = vector.shape_cast %54 : vector<1x1x8x128xf32> to vector<1x8x128xf32>
    %56 = arith.mulf %53, %55 : vector<1x8x128xf32>
    %cst_54 = arith.constant dense<0.000000e+00> : vector<8x128xf32>
    %57 = vector.multi_reduction <add>, %56, %cst_54 [0] : vector<1x8x128xf32> to vector<8x128xf32>
    %c0_55 = arith.constant 0 : index
    %c0_56 = arith.constant 0 : index
    %c3 = arith.constant 3 : index
    %c0_57 = arith.constant 0 : index
    %c0_58 = arith.constant 0 : index
    %58 = vector.load %arg3[%c0_55, %c0_56, %c3, %c0_57, %c0_58] : memref<1x4x4x8x128xf32, #tpu.memory_space<vmem>>, vector<1x1x1x8x128xf32>
    %59 = vector.shape_cast %58 : vector<1x1x1x8x128xf32> to vector<8x128xf32>
    %60 = arith.addf %59, %57 : vector<8x128xf32>
    %c0_59 = arith.constant 0 : index
    %c0_60 = arith.constant 0 : index
    %c3_61 = arith.constant 3 : index
    %c0_62 = arith.constant 0 : index
    %c0_63 = arith.constant 0 : index
    %61 = vector.load %arg3[%c0_59, %c0_60, %c3_61, %c0_62, %c0_63] : memref<1x4x4x8x128xf32, #tpu.memory_space<vmem>>, vector<1x1x1x8x128xf32>
    %62 = vector.shape_cast %61 : vector<1x1x1x8x128xf32> to vector<8x128xf32>
    %63 = vector.shape_cast %60 : vector<8x128xf32> to vector<1x1x1x8x128xf32>
    tpu.vector_store %arg3[%c0_59, %c0_60, %c3_61, %c0_62, %c0_63], %63 {strides = array<i32>} : memref<1x4x4x8x128xf32, #tpu.memory_space<vmem>>, vector<1x1x1x8x128xf32>,
    %c0_64 = arith.constant 0 : index
    %c3_65 = arith.constant 3 : index
    %c0_66 = arith.constant 0 : index
    %c0_67 = arith.constant 0 : index
    %c0_68 = arith.constant 0 : index
    %64 = vector.load %arg3[%c0_64, %c3_65, %c0_66, %c0_67, %c0_68] : memref<1x4x4x8x128xf32, #tpu.memory_space<vmem>>, vector<1x1x1x8x128xf32>
    %65 = vector.shape_cast %64 : vector<1x1x1x8x128xf32> to vector<8x128xf32>
    %66 = arith.addf %65, %57 : vector<8x128xf32>
    %c0_69 = arith.constant 0 : index
    %c3_70 = arith.constant 3 : index
    %c0_71 = arith.constant 0 : index
    %c0_72 = arith.constant 0 : index
    %c0_73 = arith.constant 0 : index
    %67 = vector.load %arg3[%c0_69, %c3_70, %c0_71, %c0_72, %c0_73] : memref<1x4x4x8x128xf32, #tpu.memory_space<vmem>>, vector<1x1x1x8x128xf32>
    %68 = vector.shape_cast %67 : vector<1x1x1x8x128xf32> to vector<8x128xf32>
    %69 = vector.shape_cast %66 : vector<8x128xf32> to vector<1x1x1x8x128xf32>
    tpu.vector_store %arg3[%c0_69, %c3_70, %c0_71, %c0_72, %c0_73], %69 {strides = array<i32>} : memref<1x4x4x8x128xf32, #tpu.memory_space<vmem>>, vector<1x1x1x8x128xf32>,
    %70 = vector.extract_strided_slice %3 {offsets = [1, 0, 0, 0], sizes = [1, 1, 8, 128], strides = [1, 1, 1, 1]} : vector<4x1x8x128xf32> to vector<1x1x8x128xf32>
    %71 = vector.shape_cast %70 : vector<1x1x8x128xf32> to vector<1x8x128xf32>
    %72 = vector.extract_strided_slice %3 {offsets = [1, 0, 0, 0], sizes = [1, 1, 8, 128], strides = [1, 1, 1, 1]} : vector<4x1x8x128xf32> to vector<1x1x8x128xf32>
    %73 = vector.shape_cast %72 : vector<1x1x8x128xf32> to vector<1x8x128xf32>
    %74 = arith.mulf %71, %73 : vector<1x8x128xf32>
    %cst_74 = arith.constant dense<0.000000e+00> : vector<8x128xf32>
    %75 = vector.multi_reduction <add>, %74, %cst_74 [0] : vector<1x8x128xf32> to vector<8x128xf32>
    %c0_75 = arith.constant 0 : index
    %c1_76 = arith.constant 1 : index
    %c1_77 = arith.constant 1 : index
    %c0_78 = arith.constant 0 : index
    %c0_79 = arith.constant 0 : index
    %76 = vector.load %arg3[%c0_75, %c1_76, %c1_77, %c0_78, %c0_79] : memref<1x4x4x8x128xf32, #tpu.memory_space<vmem>>, vector<1x1x1x8x128xf32>
    %77 = vector.shape_cast %76 : vector<1x1x1x8x128xf32> to vector<8x128xf32>
    %78 = arith.addf %77, %75 : vector<8x128xf32>
    %c0_80 = arith.constant 0 : index
    %c1_81 = arith.constant 1 : index
    %c1_82 = arith.constant 1 : index
    %c0_83 = arith.constant 0 : index
    %c0_84 = arith.constant 0 : index
    %79 = vector.load %arg3[%c0_80, %c1_81, %c1_82, %c0_83, %c0_84] : memref<1x4x4x8x128xf32, #tpu.memory_space<vmem>>, vector<1x1x1x8x128xf32>
    %80 = vector.shape_cast %79 : vector<1x1x1x8x128xf32> to vector<8x128xf32>
    %81 = vector.shape_cast %78 : vector<8x128xf32> to vector<1x1x1x8x128xf32>
    tpu.vector_store %arg3[%c0_80, %c1_81, %c1_82, %c0_83, %c0_84], %81 {strides = array<i32>} : memref<1x4x4x8x128xf32, #tpu.memory_space<vmem>>, vector<1x1x1x8x128xf32>,
    %82 = vector.extract_strided_slice %3 {offsets = [1, 0, 0, 0], sizes = [1, 1, 8, 128], strides = [1, 1, 1, 1]} : vector<4x1x8x128xf32> to vector<1x1x8x128xf32>
    %83 = vector.shape_cast %82 : vector<1x1x8x128xf32> to vector<1x8x128xf32>
    %84 = vector.extract_strided_slice %3 {offsets = [2, 0, 0, 0], sizes = [1, 1, 8, 128], strides = [1, 1, 1, 1]} : vector<4x1x8x128xf32> to vector<1x1x8x128xf32>
    %85 = vector.shape_cast %84 : vector<1x1x8x128xf32> to vector<1x8x128xf32>
    %86 = arith.mulf %83, %85 : vector<1x8x128xf32>
    %cst_85 = arith.constant dense<0.000000e+00> : vector<8x128xf32>
    %87 = vector.multi_reduction <add>, %86, %cst_85 [0] : vector<1x8x128xf32> to vector<8x128xf32>
    %c0_86 = arith.constant 0 : index
    %c1_87 = arith.constant 1 : index
    %c2_88 = arith.constant 2 : index
    %c0_89 = arith.constant 0 : index
    %c0_90 = arith.constant 0 : index
    %88 = vector.load %arg3[%c0_86, %c1_87, %c2_88, %c0_89, %c0_90] : memref<1x4x4x8x128xf32, #tpu.memory_space<vmem>>, vector<1x1x1x8x128xf32>
    %89 = vector.shape_cast %88 : vector<1x1x1x8x128xf32> to vector<8x128xf32>
    %90 = arith.addf %89, %87 : vector<8x128xf32>
    %c0_91 = arith.constant 0 : index
    %c1_92 = arith.constant 1 : index
    %c2_93 = arith.constant 2 : index
    %c0_94 = arith.constant 0 : index
    %c0_95 = arith.constant 0 : index
    %91 = vector.load %arg3[%c0_91, %c1_92, %c2_93, %c0_94, %c0_95] : memref<1x4x4x8x128xf32, #tpu.memory_space<vmem>>, vector<1x1x1x8x128xf32>
    %92 = vector.shape_cast %91 : vector<1x1x1x8x128xf32> to vector<8x128xf32>
    %93 = vector.shape_cast %90 : vector<8x128xf32> to vector<1x1x1x8x128xf32>
    tpu.vector_store %arg3[%c0_91, %c1_92, %c2_93, %c0_94, %c0_95], %93 {strides = array<i32>} : memref<1x4x4x8x128xf32, #tpu.memory_space<vmem>>, vector<1x1x1x8x128xf32>,
    %c0_96 = arith.constant 0 : index
    %c2_97 = arith.constant 2 : index
    %c1_98 = arith.constant 1 : index
    %c0_99 = arith.constant 0 : index
    %c0_100 = arith.constant 0 : index
    %94 = vector.load %arg3[%c0_96, %c2_97, %c1_98, %c0_99, %c0_100] : memref<1x4x4x8x128xf32, #tpu.memory_space<vmem>>, vector<1x1x1x8x128xf32>
    %95 = vector.shape_cast %94 : vector<1x1x1x8x128xf32> to vector<8x128xf32>
    %96 = arith.addf %95, %87 : vector<8x128xf32>
    %c0_101 = arith.constant 0 : index
    %c2_102 = arith.constant 2 : index
    %c1_103 = arith.constant 1 : index
    %c0_104 = arith.constant 0 : index
    %c0_105 = arith.constant 0 : index
    %97 = vector.load %arg3[%c0_101, %c2_102, %c1_103, %c0_104, %c0_105] : memref<1x4x4x8x128xf32, #tpu.memory_space<vmem>>, vector<1x1x1x8x128xf32>
    %98 = vector.shape_cast %97 : vector<1x1x1x8x128xf32> to vector<8x128xf32>
    %99 = vector.shape_cast %96 : vector<8x128xf32> to vector<1x1x1x8x128xf32>
    tpu.vector_store %arg3[%c0_101, %c2_102, %c1_103, %c0_104, %c0_105], %99 {strides = array<i32>} : memref<1x4x4x8x128xf32, #tpu.memory_space<vmem>>, vector<1x1x1x8x128xf32>,
    %100 = vector.extract_strided_slice %3 {offsets = [1, 0, 0, 0], sizes = [1, 1, 8, 128], strides = [1, 1, 1, 1]} : vector<4x1x8x128xf32> to vector<1x1x8x128xf32>
    %101 = vector.shape_cast %100 : vector<1x1x8x128xf32> to vector<1x8x128xf32>
    %102 = vector.extract_strided_slice %3 {offsets = [3, 0, 0, 0], sizes = [1, 1, 8, 128], strides = [1, 1, 1, 1]} : vector<4x1x8x128xf32> to vector<1x1x8x128xf32>
    %103 = vector.shape_cast %102 : vector<1x1x8x128xf32> to vector<1x8x128xf32>
    %104 = arith.mulf %101, %103 : vector<1x8x128xf32>
    %cst_106 = arith.constant dense<0.000000e+00> : vector<8x128xf32>
    %105 = vector.multi_reduction <add>, %104, %cst_106 [0] : vector<1x8x128xf32> to vector<8x128xf32>
    %c0_107 = arith.constant 0 : index
    %c1_108 = arith.constant 1 : index
    %c3_109 = arith.constant 3 : index
    %c0_110 = arith.constant 0 : index
    %c0_111 = arith.constant 0 : index
    %106 = vector.load %arg3[%c0_107, %c1_108, %c3_109, %c0_110, %c0_111] : memref<1x4x4x8x128xf32, #tpu.memory_space<vmem>>, vector<1x1x1x8x128xf32>
    %107 = vector.shape_cast %106 : vector<1x1x1x8x128xf32> to vector<8x128xf32>
    %108 = arith.addf %107, %105 : vector<8x128xf32>
    %c0_112 = arith.constant 0 : index
    %c1_113 = arith.constant 1 : index
    %c3_114 = arith.constant 3 : index
    %c0_115 = arith.constant 0 : index
    %c0_116 = arith.constant 0 : index
    %109 = vector.load %arg3[%c0_112, %c1_113, %c3_114, %c0_115, %c0_116] : memref<1x4x4x8x128xf32, #tpu.memory_space<vmem>>, vector<1x1x1x8x128xf32>
    %110 = vector.shape_cast %109 : vector<1x1x1x8x128xf32> to vector<8x128xf32>
    %111 = vector.shape_cast %108 : vector<8x128xf32> to vector<1x1x1x8x128xf32>
    tpu.vector_store %arg3[%c0_112, %c1_113, %c3_114, %c0_115, %c0_116], %111 {strides = array<i32>} : memref<1x4x4x8x128xf32, #tpu.memory_space<vmem>>, vector<1x1x1x8x128xf32>,
    %c0_117 = arith.constant 0 : index
    %c3_118 = arith.constant 3 : index
    %c1_119 = arith.constant 1 : index
    %c0_120 = arith.constant 0 : index
    %c0_121 = arith.constant 0 : index
    %112 = vector.load %arg3[%c0_117, %c3_118, %c1_119, %c0_120, %c0_121] : memref<1x4x4x8x128xf32, #tpu.memory_space<vmem>>, vector<1x1x1x8x128xf32>
    %113 = vector.shape_cast %112 : vector<1x1x1x8x128xf32> to vector<8x128xf32>
    %114 = arith.addf %113, %105 : vector<8x128xf32>
    %c0_122 = arith.constant 0 : index
    %c3_123 = arith.constant 3 : index
    %c1_124 = arith.constant 1 : index
    %c0_125 = arith.constant 0 : index
    %c0_126 = arith.constant 0 : index
    %115 = vector.load %arg3[%c0_122, %c3_123, %c1_124, %c0_125, %c0_126] : memref<1x4x4x8x128xf32, #tpu.memory_space<vmem>>, vector<1x1x1x8x128xf32>
    %116 = vector.shape_cast %115 : vector<1x1x1x8x128xf32> to vector<8x128xf32>
    %117 = vector.shape_cast %114 : vector<8x128xf32> to vector<1x1x1x8x128xf32>
    tpu.vector_store %arg3[%c0_122, %c3_123, %c1_124, %c0_125, %c0_126], %117 {strides = array<i32>} : memref<1x4x4x8x128xf32, #tpu.memory_space<vmem>>, vector<1x1x1x8x128xf32>,
    %118 = vector.extract_strided_slice %3 {offsets = [2, 0, 0, 0], sizes = [1, 1, 8, 128], strides = [1, 1, 1, 1]} : vector<4x1x8x128xf32> to vector<1x1x8x128xf32>
    %119 = vector.shape_cast %118 : vector<1x1x8x128xf32> to vector<1x8x128xf32>
    %120 = vector.extract_strided_slice %3 {offsets = [2, 0, 0, 0], sizes = [1, 1, 8, 128], strides = [1, 1, 1, 1]} : vector<4x1x8x128xf32> to vector<1x1x8x128xf32>
    %121 = vector.shape_cast %120 : vector<1x1x8x128xf32> to vector<1x8x128xf32>
    %122 = arith.mulf %119, %121 : vector<1x8x128xf32>
    %cst_127 = arith.constant dense<0.000000e+00> : vector<8x128xf32>
    %123 = vector.multi_reduction <add>, %122, %cst_127 [0] : vector<1x8x128xf32> to vector<8x128xf32>
    %c0_128 = arith.constant 0 : index
    %c2_129 = arith.constant 2 : index
    %c2_130 = arith.constant 2 : index
    %c0_131 = arith.constant 0 : index
    %c0_132 = arith.constant 0 : index
    %124 = vector.load %arg3[%c0_128, %c2_129, %c2_130, %c0_131, %c0_132] : memref<1x4x4x8x128xf32, #tpu.memory_space<vmem>>, vector<1x1x1x8x128xf32>
    %125 = vector.shape_cast %124 : vector<1x1x1x8x128xf32> to vector<8x128xf32>
    %126 = arith.addf %125, %123 : vector<8x128xf32>
    %c0_133 = arith.constant 0 : index
    %c2_134 = arith.constant 2 : index
    %c2_135 = arith.constant 2 : index
    %c0_136 = arith.constant 0 : index
    %c0_137 = arith.constant 0 : index
    %127 = vector.load %arg3[%c0_133, %c2_134, %c2_135, %c0_136, %c0_137] : memref<1x4x4x8x128xf32, #tpu.memory_space<vmem>>, vector<1x1x1x8x128xf32>
    %128 = vector.shape_cast %127 : vector<1x1x1x8x128xf32> to vector<8x128xf32>
    %129 = vector.shape_cast %126 : vector<8x128xf32> to vector<1x1x1x8x128xf32>
    tpu.vector_store %arg3[%c0_133, %c2_134, %c2_135, %c0_136, %c0_137], %129 {strides = array<i32>} : memref<1x4x4x8x128xf32, #tpu.memory_space<vmem>>, vector<1x1x1x8x128xf32>,
    %130 = vector.extract_strided_slice %3 {offsets = [2, 0, 0, 0], sizes = [1, 1, 8, 128], strides = [1, 1, 1, 1]} : vector<4x1x8x128xf32> to vector<1x1x8x128xf32>
    %131 = vector.shape_cast %130 : vector<1x1x8x128xf32> to vector<1x8x128xf32>
    %132 = vector.extract_strided_slice %3 {offsets = [3, 0, 0, 0], sizes = [1, 1, 8, 128], strides = [1, 1, 1, 1]} : vector<4x1x8x128xf32> to vector<1x1x8x128xf32>
    %133 = vector.shape_cast %132 : vector<1x1x8x128xf32> to vector<1x8x128xf32>
    %134 = arith.mulf %131, %133 : vector<1x8x128xf32>
    %cst_138 = arith.constant dense<0.000000e+00> : vector<8x128xf32>
    %135 = vector.multi_reduction <add>, %134, %cst_138 [0] : vector<1x8x128xf32> to vector<8x128xf32>
    %c0_139 = arith.constant 0 : index
    %c2_140 = arith.constant 2 : index
    %c3_141 = arith.constant 3 : index
    %c0_142 = arith.constant 0 : index
    %c0_143 = arith.constant 0 : index
    %136 = vector.load %arg3[%c0_139, %c2_140, %c3_141, %c0_142, %c0_143] : memref<1x4x4x8x128xf32, #tpu.memory_space<vmem>>, vector<1x1x1x8x128xf32>
    %137 = vector.shape_cast %136 : vector<1x1x1x8x128xf32> to vector<8x128xf32>
    %138 = arith.addf %137, %135 : vector<8x128xf32>
    %c0_144 = arith.constant 0 : index
    %c2_145 = arith.constant 2 : index
    %c3_146 = arith.constant 3 : index
    %c0_147 = arith.constant 0 : index
    %c0_148 = arith.constant 0 : index
    %139 = vector.load %arg3[%c0_144, %c2_145, %c3_146, %c0_147, %c0_148] : memref<1x4x4x8x128xf32, #tpu.memory_space<vmem>>, vector<1x1x1x8x128xf32>
    %140 = vector.shape_cast %139 : vector<1x1x1x8x128xf32> to vector<8x128xf32>
    %141 = vector.shape_cast %138 : vector<8x128xf32> to vector<1x1x1x8x128xf32>
    tpu.vector_store %arg3[%c0_144, %c2_145, %c3_146, %c0_147, %c0_148], %141 {strides = array<i32>} : memref<1x4x4x8x128xf32, #tpu.memory_space<vmem>>, vector<1x1x1x8x128xf32>,
    %c0_149 = arith.constant 0 : index
    %c3_150 = arith.constant 3 : index
    %c2_151 = arith.constant 2 : index
    %c0_152 = arith.constant 0 : index
    %c0_153 = arith.constant 0 : index
    %142 = vector.load %arg3[%c0_149, %c3_150, %c2_151, %c0_152, %c0_153] : memref<1x4x4x8x128xf32, #tpu.memory_space<vmem>>, vector<1x1x1x8x128xf32>
    %143 = vector.shape_cast %142 : vector<1x1x1x8x128xf32> to vector<8x128xf32>
    %144 = arith.addf %143, %135 : vector<8x128xf32>
    %c0_154 = arith.constant 0 : index
    %c3_155 = arith.constant 3 : index
    %c2_156 = arith.constant 2 : index
    %c0_157 = arith.constant 0 : index
    %c0_158 = arith.constant 0 : index
    %145 = vector.load %arg3[%c0_154, %c3_155, %c2_156, %c0_157, %c0_158] : memref<1x4x4x8x128xf32, #tpu.memory_space<vmem>>, vector<1x1x1x8x128xf32>
    %146 = vector.shape_cast %145 : vector<1x1x1x8x128xf32> to vector<8x128xf32>
    %147 = vector.shape_cast %144 : vector<8x128xf32> to vector<1x1x1x8x128xf32>
    tpu.vector_store %arg3[%c0_154, %c3_155, %c2_156, %c0_157, %c0_158], %147 {strides = array<i32>} : memref<1x4x4x8x128xf32, #tpu.memory_space<vmem>>, vector<1x1x1x8x128xf32>,
    %148 = vector.extract_strided_slice %3 {offsets = [3, 0, 0, 0], sizes = [1, 1, 8, 128], strides = [1, 1, 1, 1]} : vector<4x1x8x128xf32> to vector<1x1x8x128xf32>
    %149 = vector.shape_cast %148 : vector<1x1x8x128xf32> to vector<1x8x128xf32>
    %150 = vector.extract_strided_slice %3 {offsets = [3, 0, 0, 0], sizes = [1, 1, 8, 128], strides = [1, 1, 1, 1]} : vector<4x1x8x128xf32> to vector<1x1x8x128xf32>
    %151 = vector.shape_cast %150 : vector<1x1x8x128xf32> to vector<1x8x128xf32>
    %152 = arith.mulf %149, %151 : vector<1x8x128xf32>
    %cst_159 = arith.constant dense<0.000000e+00> : vector<8x128xf32>
    %153 = vector.multi_reduction <add>, %152, %cst_159 [0] : vector<1x8x128xf32> to vector<8x128xf32>
    %c0_160 = arith.constant 0 : index
    %c3_161 = arith.constant 3 : index
    %c3_162 = arith.constant 3 : index
    %c0_163 = arith.constant 0 : index
    %c0_164 = arith.constant 0 : index
    %154 = vector.load %arg3[%c0_160, %c3_161, %c3_162, %c0_163, %c0_164] : memref<1x4x4x8x128xf32, #tpu.memory_space<vmem>>, vector<1x1x1x8x128xf32>
    %155 = vector.shape_cast %154 : vector<1x1x1x8x128xf32> to vector<8x128xf32>
    %156 = arith.addf %155, %153 : vector<8x128xf32>
    %c0_165 = arith.constant 0 : index
    %c3_166 = arith.constant 3 : index
    %c3_167 = arith.constant 3 : index
    %c0_168 = arith.constant 0 : index
    %c0_169 = arith.constant 0 : index
    %157 = vector.load %arg3[%c0_165, %c3_166, %c3_167, %c0_168, %c0_169] : memref<1x4x4x8x128xf32, #tpu.memory_space<vmem>>, vector<1x1x1x8x128xf32>
    %158 = vector.shape_cast %157 : vector<1x1x1x8x128xf32> to vector<8x128xf32>
    %159 = vector.shape_cast %156 : vector<8x128xf32> to vector<1x1x1x8x128xf32>
    tpu.vector_store %arg3[%c0_165, %c3_166, %c3_167, %c0_168, %c0_169], %159 {strides = array<i32>} : memref<1x4x4x8x128xf32, #tpu.memory_space<vmem>>, vector<1x1x1x8x128xf32>,
    return
  }
  func.func @transform_0(%arg0: i32, %arg1: i32) -> (i32, i32, i32, i32) {
    %c1_i32 = arith.constant 1 : i32
    %0 = arith.muli %arg0, %c1_i32 : i32
    %1 = arith.addi %0, %arg1 : i32
    %c0_i32 = arith.constant 0 : i32
    %c0_i32_0 = arith.constant 0 : i32
    %c0_i32_1 = arith.constant 0 : i32
    %c0_i32_2 = arith.constant 0 : i32
    return %c0_i32, %1, %c0_i32_0, %c0_i32_1 : i32, i32, i32, i32
  }
  func.func @transform_1(%arg0: i32, %arg1: i32) -> (i32, i32, i32, i32, i32) {
    %c0_i32 = arith.constant 0 : i32
    %c0_i32_0 = arith.constant 0 : i32
    %c0_i32_1 = arith.constant 0 : i32
    %c0_i32_2 = arith.constant 0 : i32
    %c0_i32_3 = arith.constant 0 : i32
    return %arg0, %c0_i32, %c0_i32_0, %c0_i32_1, %c0_i32_2 : i32, i32, i32, i32, i32
  }
}

module attributes {stable_mosaic.version = 11 : i64} {
  func.func @_combine_kernel(%arg0: i32, %arg1: memref<4xf32, #tpu.memory_space<smem>>, %arg2: memref<4x1024xf32, #tpu.memory_space<vmem>>, %arg3: memref<4x1024xf32, #tpu.memory_space<vmem>>) attributes {dimension_semantics = [#tpu.dimension_semantics<parallel>], iteration_bounds = array<i64: 1>, scalar_prefetch = 1 : i64, scratch_operands = 0 : i64, tpu.core_type = #tpu.core_type<tc>, window_params = [{transform_indices = @transform_0, window_bounds = array<i64: 4, 1024>}, {transform_indices = @transform_1, window_bounds = array<i64: 4, 1024>}]} {
    %c0 = arith.constant 0 : index
    %c0_0 = arith.constant 0 : index
    %0 = vector.load %arg2[%c0, %c0_0] : memref<4x1024xf32, #tpu.memory_space<vmem>>, vector<4x1024xf32>
    %1 = tpu.iota {dimensions = array<i32: 0>} : vector<4x1xi32>
    %cst = arith.constant 0.000000e+00 : f32
    %2 = vector.broadcast %cst : f32 to vector<4x1xf32>
    %c0_i32 = arith.constant 0 : i32
    %3 = vector.broadcast %c0_i32 : i32 to vector<4x1xi32>
    %4 = arith.cmpi eq, %1, %3 : vector<4x1xi32>
    %c0_1 = arith.constant 0 : index
    %5 = memref.load %arg1[%c0_1] : memref<4xf32, #tpu.memory_space<smem>>
    %6 = vector.broadcast %5 : f32 to vector<4x1xf32>
    %7 = arith.select %4, %6, %2 : vector<4x1xi1>, vector<4x1xf32>
    %c1_i32 = arith.constant 1 : i32
    %8 = vector.broadcast %c1_i32 : i32 to vector<4x1xi32>
    %9 = arith.cmpi eq, %1, %8 : vector<4x1xi32>
    %c1 = arith.constant 1 : index
    %10 = memref.load %arg1[%c1] : memref<4xf32, #tpu.memory_space<smem>>
    %11 = vector.broadcast %10 : f32 to vector<4x1xf32>
    %12 = arith.select %9, %11, %7 : vector<4x1xi1>, vector<4x1xf32>
    %c2_i32 = arith.constant 2 : i32
    %13 = vector.broadcast %c2_i32 : i32 to vector<4x1xi32>
    %14 = arith.cmpi eq, %1, %13 : vector<4x1xi32>
    %c2 = arith.constant 2 : index
    %15 = memref.load %arg1[%c2] : memref<4xf32, #tpu.memory_space<smem>>
    %16 = vector.broadcast %15 : f32 to vector<4x1xf32>
    %17 = arith.select %14, %16, %12 : vector<4x1xi1>, vector<4x1xf32>
    %c3_i32 = arith.constant 3 : i32
    %18 = vector.broadcast %c3_i32 : i32 to vector<4x1xi32>
    %19 = arith.cmpi eq, %1, %18 : vector<4x1xi32>
    %c3 = arith.constant 3 : index
    %20 = memref.load %arg1[%c3] : memref<4xf32, #tpu.memory_space<smem>>
    %21 = vector.broadcast %20 : f32 to vector<4x1xf32>
    %22 = arith.select %19, %21, %17 : vector<4x1xi1>, vector<4x1xf32>
    %23 = vector.broadcast %22 : vector<4x1xf32> to vector<4x1024xf32>
    %24 = arith.mulf %23, %0 : vector<4x1024xf32>
    %cst_2 = arith.constant dense<0.000000e+00> : vector<1024xf32>
    %25 = vector.multi_reduction <add>, %24, %cst_2 [0] : vector<4x1024xf32> to vector<1024xf32>
    %26 = vector.shape_cast %25 : vector<1024xf32> to vector<1x1024xf32>
    %cst_3 = arith.constant 2.500000e-01 : f32
    %27 = vector.broadcast %cst_3 : f32 to vector<4x1024xf32>
    %28 = arith.mulf %0, %27 : vector<4x1024xf32>
    %29 = vector.broadcast %26 : vector<1x1024xf32> to vector<4x1024xf32>
    %30 = arith.addf %28, %29 : vector<4x1024xf32>
    %c0_4 = arith.constant 0 : index
    %c0_5 = arith.constant 0 : index
    %31 = vector.load %arg3[%c0_4, %c0_5] : memref<4x1024xf32, #tpu.memory_space<vmem>>, vector<4x1024xf32>
    tpu.vector_store %arg3[%c0_4, %c0_5], %30 {strides = array<i32>} : memref<4x1024xf32, #tpu.memory_space<vmem>>, vector<4x1024xf32>,
    return
  }
  func.func @transform_0(%arg0: i32, %arg1: memref<4xf32, #tpu.memory_space<smem>>) -> (i32, i32) {
    %c0_i32 = arith.constant 0 : i32
    %c0_i32_0 = arith.constant 0 : i32
    return %c0_i32, %arg0 : i32, i32
  }
  func.func @transform_1(%arg0: i32, %arg1: memref<4xf32, #tpu.memory_space<smem>>) -> (i32, i32) {
    %c0_i32 = arith.constant 0 : i32
    %c0_i32_0 = arith.constant 0 : i32
    return %c0_i32, %arg0 : i32, i32
  }
}

</mosaic_0001>

<llo_original>
// kernel: custom-call
$region0: #{custom-call}
  %s0 = inlined_call_operand.vmem [shape: f32[4], index: 0, kind: output, shape index: {}]

// kernel: cagrad_forward.2
$region0: #{cagrad_forward.2}
  #allocation0 [shape = 'u32[]', space=smem, size = 0x4, offset = 0x4, fixed_abs, tag = 'smem constant byte address 0x4 - core index']
  #allocation1 [shape = 'u32[144,128]{1,0:T(1,128)}', space=vmem, size = 0x12000, scoped, tag = 'internal scratch']
  %s0 = inlined_call_operand.hbm [shape: f32[4,1,8,128], index: 0, kind: input, shape index: {}]
  %s1 = inlined_call_operand.vmem [shape: f32[1,4,4,8,128], index: 1, kind: output, shape index: {}]
  %s2 = sld [smem:[#allocation0]]
  $region22: #{cagrad_forward.2} parent=0
    _
  %s4 = ssub.s32 1, %s2
  %s5 = scalar_select 0, %s4, %s2
  $region1: #{cagrad_forward.2} parent=0
    #allocation2 [shape = 'u8[16384]{0}', space=vmem, size = 0x4000, scoped, tag = 'input window, operand 0, single buffered']
    #allocation3 [shape = 's32[1]{0}', space=sflag, size = 0x4, scoped, tag = 'scoped memory for cagrad_forward.2']
    %6 = vsyncpa [#allocation3], 0
    // Predicated region
    $region2: #{cagrad_forward.2} parent=1 // pred_check
      _
    $region3: #{cagrad_forward.2} parent=1 // pred_check_branch
      %8 = sbr.rel (0) target = $region5
    $region4: #{cagrad_forward.2} parent=1 // pred_region
      %s9 = sadd.s32 0, 0
      %s11 = ssub.s32 512, 512
      %12 = vsyncadd [#allocation3], %s11
      %s13 = smul.addr %s9, 128
      %s14 = scalar_lea.hbm %s0, %s13
      %s15 = sshll.u32 [#allocation2], 4
      %s16 = int_to_ptr.vmem [resolvable:$true] %s15
      %21 = dma.hbm_to_vmem [thread:$0]  %s14, 512, %s16, [#allocation3], 128, 128, 8
    $region5: #{cagrad_forward.2} parent=1 // pred_fallthru
      _
    // Predicated region
    $region6: #{cagrad_forward.2} parent=1 // pred_check
      _
    $region7: #{cagrad_forward.2} parent=1 // pred_check_branch
      %23 = sbr.rel (0) target = $region9
    $region8: #{cagrad_forward.2} parent=1 // pred_region
      %24 = dma.done [#allocation3], 512
    $region9: #{cagrad_forward.2} parent=1 // pred_fallthru
      _
    %s25 = sadd.s32 0, 0
    %p26 = scmp.eq.s32.totalorder 0, 0
    // Predicated region
    $region10: #{cagrad_forward.2} parent=1 // pred_check
      %p27 = pneg %p26
    $region11: #{cagrad_forward.2} parent=1 // pred_check_branch
      %29 = sbr.rel (%p27) target = $region13
    $region12: #{cagrad_forward.2} parent=1 // pred_region
      %30 = vst [vmem:[%s1] sm:$0xff] 0.0
      %31 = vst [vmem:[%s1 + $0x8] sm:$0xff] 0.0
      %32 = vst [vmem:[%s1 + $0x10] sm:$0xff] 0.0
      %33 = vst [vmem:[%s1 + $0x18] sm:$0xff] 0.0
      %34 = vst [vmem:[%s1 + $0x20] sm:$0xff] 0.0
      %35 = vst [vmem:[%s1 + $0x28] sm:$0xff] 0.0
      %36 = vst [vmem:[%s1 + $0x30] sm:$0xff] 0.0
      %37 = vst [vmem:[%s1 + $0x38] sm:$0xff] 0.0
      %38 = vst [vmem:[%s1 + $0x40] sm:$0xff] 0.0
      %39 = vst [vmem:[%s1 + $0x48] sm:$0xff] 0.0
      %40 = vst [vmem:[%s1 + $0x50] sm:$0xff] 0.0
      %41 = vst [vmem:[%s1 + $0x58] sm:$0xff] 0.0
      %42 = vst [vmem:[%s1 + $0x60] sm:$0xff] 0.0
      %43 = vst [vmem:[%s1 + $0x68] sm:$0xff] 0.0
      %44 = vst [vmem:[%s1 + $0x70] sm:$0xff] 0.0
      %45 = vst [vmem:[%s1 + $0x78] sm:$0xff] 0.0
    $region13: #{cagrad_forward.2} parent=1 // pred_fallthru
      _
    %v46 = vld [vmem:[#allocation2] sm:$0xff]
    %v47 = vld [vmem:[#allocation2 + $0x8] sm:$0xff]
    %v48 = vld [vmem:[#allocation2 + $0x10] sm:$0xff]
    %v49 = vld [vmem:[#allocation2 + $0x18] sm:$0xff]
    %v50 = vmul.f32 %v46, %v46
    %v51 = vadd.f32 %v50, 0.0
    %v52 = vld [vmem:[%s1] sm:$0xff]
    %v53 = vadd.f32 %v52, %v51
    %54 = vst [vmem:[%s1] sm:$0xff] %v53
    %v55 = vmul.f32 %v46, %v47
    %v56 = vadd.f32 %v55, 0.0
    %s57 = scalar_lea.vmem %s1, 8
    %v58 = vld [vmem:[%s57] sm:$0xff]
    %v59 = vadd.f32 %v58, %v56
    %60 = vst [vmem:[%s57] sm:$0xff] %v59
    %s61 = scalar_lea.vmem %s1, 32
    %v62 = vld [vmem:[%s61] sm:$0xff]
    %v63 = vadd.f32 %v62, %v56
    %64 = vst [vmem:[%s61] sm:$0xff] %v63
    %v65 = vmul.f32 %v46, %v48
    %v66 = vadd.f32 %v65, 0.0
    %s67 = scalar_lea.vmem %s1, 16
    %v68 = vld [vmem:[%s67] sm:$0xff]
    %v69 = vadd.f32 %v68, %v66
    %70 = vst [vmem:[%s67] sm:$0xff] %v69
    %s71 = scalar_lea.vmem %s1, 64
    %v72 = vld [vmem:[%s71] sm:$0xff]
    %v73 = vadd.f32 %v72, %v66
    %74 = vst [vmem:[%s71] sm:$0xff] %v73
    %v75 = vmul.f32 %v46, %v49
    %v76 = vadd.f32 %v75, 0.0
    %s77 = scalar_lea.vmem %s1, 24
    %v78 = vld [vmem:[%s77] sm:$0xff]
    %v79 = vadd.f32 %v78, %v76
    %80 = vst [vmem:[%s77] sm:$0xff] %v79
    %s81 = scalar_lea.vmem %s1, 96
    %v82 = vld [vmem:[%s81] sm:$0xff]
    %v83 = vadd.f32 %v82, %v76
    %84 = vst [vmem:[%s81] sm:$0xff] %v83
    %v85 = vmul.f32 %v47, %v47
    %v86 = vadd.f32 %v85, 0.0
    %s87 = scalar_lea.vmem %s1, 40
    %v88 = vld [vmem:[%s87] sm:$0xff]
    %v89 = vadd.f32 %v88, %v86
    %90 = vst [vmem:[%s87] sm:$0xff] %v89
    %v91 = vmul.f32 %v47, %v48
    %v92 = vadd.f32 %v91, 0.0
    %s93 = scalar_lea.vmem %s1, 48
    %v94 = vld [vmem:[%s93] sm:$0xff]
    %v95 = vadd.f32 %v94, %v92
    %96 = vst [vmem:[%s93] sm:$0xff] %v95
    %s97 = scalar_lea.vmem %s1, 72
    %v98 = vld [vmem:[%s97] sm:$0xff]
    %v99 = vadd.f32 %v98, %v92
    %100 = vst [vmem:[%s97] sm:$0xff] %v99
    %v101 = vmul.f32 %v47, %v49
    %v102 = vadd.f32 %v101, 0.0
    %s103 = scalar_lea.vmem %s1, 56
    %v104 = vld [vmem:[%s103] sm:$0xff]
    %v105 = vadd.f32 %v104, %v102
    %106 = vst [vmem:[%s103] sm:$0xff] %v105
    %s107 = scalar_lea.vmem %s1, 104
    %v108 = vld [vmem:[%s107] sm:$0xff]
    %v109 = vadd.f32 %v108, %v102
    %110 = vst [vmem:[%s107] sm:$0xff] %v109
    %v111 = vmul.f32 %v48, %v48
    %v112 = vadd.f32 %v111, 0.0
    %s113 = scalar_lea.vmem %s1, 80
    %v114 = vld [vmem:[%s113] sm:$0xff]
    %v115 = vadd.f32 %v114, %v112
    %116 = vst [vmem:[%s113] sm:$0xff] %v115
    %v117 = vmul.f32 %v48, %v49
    %v118 = vadd.f32 %v117, 0.0
    %s119 = scalar_lea.vmem %s1, 88
    %v120 = vld [vmem:[%s119] sm:$0xff]
    %v121 = vadd.f32 %v120, %v118
    %122 = vst [vmem:[%s119] sm:$0xff] %v121
    %s123 = scalar_lea.vmem %s1, 112
    %v124 = vld [vmem:[%s123] sm:$0xff]
    %v125 = vadd.f32 %v124, %v118
    %126 = vst [vmem:[%s123] sm:$0xff] %v125
    %v127 = vmul.f32 %v49, %v49
    %v128 = vadd.f32 %v127, 0.0
    %s129 = scalar_lea.vmem %s1, 120
    %v130 = vld [vmem:[%s129] sm:$0xff]
    %v131 = vadd.f32 %v130, %v128
    %132 = vst [vmem:[%s129] sm:$0xff] %v131
    // Predicated region
    $region14: #{cagrad_forward.2} parent=1 // pred_check
      _
    $region15: #{cagrad_forward.2} parent=1 // pred_check_branch
      %134 = sbr.rel (0) target = $region17
    $region16: #{cagrad_forward.2} parent=1 // pred_region
      _
    $region17: #{cagrad_forward.2} parent=1 // pred_fallthru
      _
    // Predicated region
    $region18: #{cagrad_forward.2} parent=1 // pred_check
      _
    $region19: #{cagrad_forward.2} parent=1 // pred_check_branch
      %136 = sbr.rel (0) target = $region21
    $region20: #{cagrad_forward.2} parent=1 // pred_region
      _
    $region21: #{cagrad_forward.2} parent=1 // pred_fallthru
      _
    %137 = vsyncpa [#allocation3], 1

// kernel: cagrad_forward.3
$region0: #{cagrad_forward.3}
  #allocation0 [shape = 'u32[]', space=smem, size = 0x4, offset = 0x4, fixed_abs, tag = 'smem constant byte address 0x4 - core index']
  #allocation1 [shape = 'u32[144,128]{1,0:T(1,128)}', space=vmem, size = 0x12000, scoped, tag = 'internal scratch']
  #allocation2 [shape = 's32[1]{0}', space=sflag, size = 0x4, scoped, tag = 'scoped memory for cagrad_forward.3']
  #allocation3 [shape = 'u8[512]{0}', space=smem, size = 0x200, scoped, tag = 'prefetched SMEM operand 0']
  %s0 = inlined_call_operand.vmem [shape: f32[4], index: 0, kind: input, shape index: {}]
  %s1 = inlined_call_operand.vmem [shape: f32[4,1024], index: 1, kind: input, shape index: {}]
  %s2 = inlined_call_operand.vmem [shape: f32[4,1024], index: 2, kind: output, shape index: {}]
  %s3 = sld [smem:[#allocation0]]
  $region14: #{cagrad_forward.3} parent=0
    _
  %s5 = ssub.s32 1, %s3
  %s6 = scalar_select 0, %s5, %s3
  %s7 = sshll.u32 %s0, 4
  %s8 = int_to_ptr.vmem [resolvable:$true] %s7
  %10 = dma.vmem_to_smem %s8, 16, [#allocation3], [#allocation2]
  %11 = dma.done [#allocation2], 16
  %12 = sfence
  // Predicated region
  $region2: #{cagrad_forward.3} parent=0 // pred_check
    _
  $region3: #{cagrad_forward.3} parent=0 // pred_check_branch
    %14 = sbr.rel (0) target = $region5
  $region4: #{cagrad_forward.3} parent=0 // pred_region
    _
  $region5: #{cagrad_forward.3} parent=0 // pred_fallthru
    _
  %v15 = vld [vmem:[%s1] sm:$0xff]
  %v16 = vld [vmem:[%s1 + $0x8] sm:$0xff]
  %v17 = vld [vmem:[%s1 + $0x10] sm:$0xff]
  %v18 = vld [vmem:[%s1 + $0x18] sm:$0xff]
  %v19 = vlaneseq
  %v20 = vshrl.u32 %v19, 7
  %vm21 = vcmp.eq.s32.totalorder %v20, 0
  %s22 = sld [smem:[#allocation3]]
  %v23 = vstv %s22
  %v24 = vsel %vm21, %v23, 0.0
  %vm25 = vcmp.eq.s32.totalorder %v20, 1
  %s26 = sld [smem:[#allocation3 + $0x1]]
  %v27 = vstv %s26
  %v28 = vsel %vm25, %v27, %v24
  %vm29 = vcmp.eq.s32.totalorder %v20, 2
  %s30 = sld [smem:[#allocation3 + $0x2]]
  %v31 = vstv %s30
  %v32 = vsel %vm29, %v31, %v28
  %vm33 = vcmp.eq.s32.totalorder %v20, 3
  %s34 = sld [smem:[#allocation3 + $0x3]]
  %v35 = vstv %s34
  %v36 = vsel %vm33, %v35, %v32
  %v41 = vcombine.high %v15, %v15
  %v42 = vcombine.high %v16, %v16
  %v43 = vcombine.high %v17, %v17
  %v44 = vcombine.high %v18, %v18
  %v49 = vmul.f32 %v36, %v15
  %v50 = vmul.f32 %v36, %v41
  %v51 = vmul.f32 %v36, %v16
  %v52 = vmul.f32 %v36, %v42
  %v53 = vmul.f32 %v36, %v17
  %v54 = vmul.f32 %v36, %v43
  %v55 = vmul.f32 %v36, %v18
  %v56 = vmul.f32 %v36, %v44
  %vm57 = vcmask 1043456
  %v58 = vsel %vm57, %v49, 0.0
  %v59 = vrot.slane %v58, 4
  %v60 = vadd.f32 %v58, %v59
  %v61 = vrot.slane %v60, 2
  %v62 = vadd.f32 %v60, %v61
  %v63 = vrot.slane %v62, 1
  %v64 = vadd.f32 %v62, %v63
  %v65 = vsel %vm57, %v50, 0.0
  %v66 = vrot.slane %v65, 4
  %v67 = vadd.f32 %v65, %v66
  %v68 = vrot.slane %v67, 2
  %v69 = vadd.f32 %v67, %v68
  %v70 = vrot.slane %v69, 1
  %v71 = vadd.f32 %v69, %v70
  %v72 = vsel %vm57, %v51, 0.0
  %v73 = vrot.slane %v72, 4
  %v74 = vadd.f32 %v72, %v73
  %v75 = vrot.slane %v74, 2
  %v76 = vadd.f32 %v74, %v75
  %v77 = vrot.slane %v76, 1
  %v78 = vadd.f32 %v76, %v77
  %v79 = vsel %vm57, %v52, 0.0
  %v80 = vrot.slane %v79, 4
  %v81 = vadd.f32 %v79, %v80
  %v82 = vrot.slane %v81, 2
  %v83 = vadd.f32 %v81, %v82
  %v84 = vrot.slane %v83, 1
  %v85 = vadd.f32 %v83, %v84
  %v86 = vsel %vm57, %v53, 0.0
  %v87 = vrot.slane %v86, 4
  %v88 = vadd.f32 %v86, %v87
  %v89 = vrot.slane %v88, 2
  %v90 = vadd.f32 %v88, %v89
  %v91 = vrot.slane %v90, 1
  %v92 = vadd.f32 %v90, %v91
  %v93 = vsel %vm57, %v54, 0.0
  %v94 = vrot.slane %v93, 4
  %v95 = vadd.f32 %v93, %v94
  %v96 = vrot.slane %v95, 2
  %v97 = vadd.f32 %v95, %v96
  %v98 = vrot.slane %v97, 1
  %v99 = vadd.f32 %v97, %v98
  %v100 = vsel %vm57, %v55, 0.0
  %v101 = vrot.slane %v100, 4
  %v102 = vadd.f32 %v100, %v101
  %v103 = vrot.slane %v102, 2
  %v104 = vadd.f32 %v102, %v103
  %v105 = vrot.slane %v104, 1
  %v106 = vadd.f32 %v104, %v105
  %v107 = vsel %vm57, %v56, 0.0
  %v108 = vrot.slane %v107, 4
  %v109 = vadd.f32 %v107, %v108
  %v110 = vrot.slane %v109, 2
  %v111 = vadd.f32 %v109, %v110
  %v112 = vrot.slane %v111, 1
  %v113 = vadd.f32 %v111, %v112
  %v114 = vmul.f32 %v15, 0.25
  %v115 = vmul.f32 %v16, 0.25
  %v116 = vmul.f32 %v17, 0.25
  %v117 = vmul.f32 %v18, 0.25
  %v126 = vcombine.low %v64, %v71
  %v127 = vcombine.low %v78, %v85
  %v128 = vcombine.low %v92, %v99
  %v129 = vcombine.low %v106, %v113
  %v134 = vadd.f32 %v114, %v126
  %v135 = vadd.f32 %v115, %v127
  %v136 = vadd.f32 %v116, %v128
  %v137 = vadd.f32 %v117, %v129
  %138 = vst [vmem:[%s2] sm:$0xff] %v134
  %139 = vst [vmem:[%s2 + $0x8] sm:$0xff] %v135
  %140 = vst [vmem:[%s2 + $0x10] sm:$0xff] %v136
  %141 = vst [vmem:[%s2 + $0x18] sm:$0xff] %v137
  // Predicated region
  $region6: #{cagrad_forward.3} parent=0 // pred_check
    _
  $region7: #{cagrad_forward.3} parent=0 // pred_check_branch
    %143 = sbr.rel (0) target = $region9
  $region8: #{cagrad_forward.3} parent=0 // pred_region
    _
  $region9: #{cagrad_forward.3} parent=0 // pred_fallthru
    _
  // Predicated region
  $region10: #{cagrad_forward.3} parent=0 // pred_check
    _
  $region11: #{cagrad_forward.3} parent=0 // pred_check_branch
    %145 = sbr.rel (0) target = $region13
  $region12: #{cagrad_forward.3} parent=0 // pred_region
    _
  $region13: #{cagrad_forward.3} parent=0 // pred_fallthru
    _

</llo_original>
